<compile_context>
chip_gen: v7x
topology: tpu7x:2x2x1
jax: 0.10.0
libtpu: 0.0.40
codegen_flags: <defaults>
</compile_context>

<pallas_src>
import functools

import jax
import jax.numpy as jnp
from jax.experimental import pallas as pl
from jax.experimental.pallas import tpu as pltpu

_SUBLANE = 8                      # batch tiles must be sublane-aligned
_TM_MAX = 8192                    # cap per-step tile; keeps grid pipelined
_DEFAULT_TILE_BUDGET = 8 << 20    # ~8 MiB of (x + out) per pipeline step


def _round_up(x, m):
    return (x + m - 1) // m * m


def _logreg_kernel(x_ref, w_ref, b_ref, o_ref):
    # x_ref: [TM, K]  batch tile (compute dtype, bf16 by default)
    # w_ref: [K, N]   weight, pre-transposed at init (MXU-native [K, N])
    # b_ref: [1, N]   f32 bias
    # o_ref: [TM, N]  f32 output tile, N == d_out (unpadded)
    z = jnp.dot(x_ref[...], w_ref[...], preferred_element_type=jnp.float32)
    z = z + b_ref[...]
    # Numerically-stable sigmoid: exp never overflows; exp and the approx
    # reciprocal both execute on the EUP slot, leaving the VALU free.
    e = jnp.exp(-jnp.abs(z))
    inv = pl.reciprocal(1.0 + e, approx=True)
    o_ref[...] = jnp.where(z >= 0.0, inv, e * inv).astype(o_ref.dtype)


def prepare_params(weight, bias, compute_dtype=jnp.bfloat16):
    """One-time parameter prep (at init, NOT per forward call).

    - Transpose the PyTorch nn.Linear weight [d_out, d_in] -> [d_in, d_out]
      once, so the kernel feeds the MXU its native stationary layout with no
      per-step transpose and a lane-dense N axis.
    - Cast the weight to the compute dtype (bf16 is MXU-native on
      v5e/v6e/v7x and halves the resident-weight bytes); accumulation and
      the epilogue stay f32.
    - No output-dim padding: outputs are emitted at their true width d_out.
    """
    d_out, d_in = weight.shape
    w_t = jnp.asarray(weight, jnp.float32).T.astype(compute_dtype)  # [d_in, d_out]
    b2 = jnp.asarray(bias, jnp.float32).reshape(1, d_out)
    return w_t, b2


@jax.jit
def logistic_regression_forward(x, w_t, b2):
    """sigmoid(x @ W^T + b).  x: [B, d_in]; w_t: [d_in, d_out]; b2: [1, d_out]."""
    B, d_in = x.shape
    d_in_w, d_out = w_t.shape
    assert d_in == d_in_w, "LazyLinear in_features is inferred from the first input"

    compute_dtype = w_t.dtype
    # Upstream should already hand us bf16 activations for the full bandwidth
    # win; this cast is a no-op in that case.
    x_c = x.astype(compute_dtype)

    x_bytes = jnp.dtype(compute_dtype).itemsize
    out_bytes = jnp.dtype(jnp.float32).itemsize

    # Batch tile from a VMEM byte budget (double-buffered x + out per step),
    # sublane-aligned, clamped for small B, capped so tiles stay a few MiB.
    row_bytes = d_in * x_bytes + d_out * out_bytes
    tm = (_DEFAULT_TILE_BUDGET // (2 * row_bytes)) // _SUBLANE * _SUBLANE
    tm = max(_SUBLANE, min(tm, _TM_MAX, _round_up(B, _SUBLANE)))
    grid = (pl.cdiv(B, tm),)

    # Explicit scoped-VMEM sizing: double-buffered x/out tiles + the resident
    # (double-buffered) weight/bias + headroom; never exceeds v7x's 64 MiB.
    w_res_bytes = d_in * d_out * x_bytes + d_out * out_bytes
    vmem_need = 2 * tm * row_bytes + 2 * w_res_bytes + (1 << 20)
    vmem_limit = int(min(max(vmem_need, 32 << 20), 64 << 20))
    # TODO(synk): if the resident weight alone exceeds ~half the v7x budget
    # (very large d_in*d_out), add an N-tiling grid axis with weight blocks
    # instead of keeping the full weight resident.

    return pl.pallas_call(
        _logreg_kernel,
        out_shape=jax.ShapeDtypeStruct((B, d_out), jnp.float32),
        grid=grid,
        in_specs=[
            pl.BlockSpec((tm, d_in), lambda i: (i, 0)),      # x batch tile
            pl.BlockSpec((d_in, d_out), lambda i: (0, 0)),   # resident weight
            pl.BlockSpec((1, d_out), lambda i: (0, 0)),      # resident bias
        ],
        out_specs=pl.BlockSpec((tm, d_out), lambda i: (i, 0)),
        compiler_params=pltpu.CompilerParams(
            # Batch axis is embarrassingly parallel (shards across the two
            # TensorCores on v7x; harmless on single-TC v5e/v6e).
            dimension_semantics=("parallel",),
            vmem_limit_bytes=vmem_limit,
        ),
        cost_estimate=pl.CostEstimate(
            flops=2 * B * d_in * d_out,
            transcendentals=B * d_out,
            bytes_accessed=(x_bytes * B * d_in + x_bytes * d_in * d_out
                            + out_bytes * d_out + out_bytes * B * d_out),
        ),
    )(x_c, w_t, b2)


if __name__ == "__main__":
    key = jax.random.PRNGKey(0)
    k_x, k_w, k_b = jax.random.split(key, 3)

    batch = 16
    in_features = 32      # LazyLinear infers this from the first input
    output_dim = 8

    x = jax.random.normal(k_x, (batch, in_features), dtype=jnp.float32)

    # Deterministic init mimicking torch.nn.Linear defaults:
    # U(-1/sqrt(fan_in), 1/sqrt(fan_in)).
    bound = 1.0 / jnp.sqrt(jnp.float32(in_features))
    weight = jax.random.uniform(
        k_w, (output_dim, in_features), minval=-bound, maxval=bound,
        dtype=jnp.float32)
    bias = jax.random.uniform(
        k_b, (output_dim,), minval=-bound, maxval=bound, dtype=jnp.float32)

    w_t, b2 = prepare_params(weight, bias)       # bf16 [d_in, d_out] weight, f32 bias
    x_bf16 = x.astype(jnp.bfloat16)              # bandwidth-optimal activations
    out = logistic_regression_forward(x_bf16, w_t, b2)
    out = jax.block_until_ready(out)

    ref = jax.nn.sigmoid(x @ weight.T + bias)    # f32 reference
    assert out.shape == (batch, output_dim)
    err = float(jnp.max(jnp.abs(out - ref)))
    # bf16 inputs + approx reciprocal -> loose-but-tight-enough tolerance.
    assert err < 5e-3, err

    print("KERNEL_OK")
</pallas_src>

<mosaic_0001>
module attributes {stable_mosaic.version = 11 : i64} {
  func.func @_logreg_kernel(%arg0: i32, %arg1: memref<16x32xbf16, #tpu.memory_space<vmem>>, %arg2: memref<32x8xbf16, #tpu.memory_space<vmem>>, %arg3: memref<1x8xf32, #tpu.memory_space<vmem>>, %arg4: memref<16x8xf32, #tpu.memory_space<vmem>>) attributes {dimension_semantics = [#tpu.dimension_semantics<parallel>], iteration_bounds = array<i64: 1>, scalar_prefetch = 0 : i64, scratch_operands = 0 : i64, tpu.core_type = #tpu.core_type<tc>, window_params = [{transform_indices = @transform_0, window_bounds = array<i64: 16, 32>}, {pipeline_mode = #tpu.pipeline_mode<synchronous>, transform_indices = @transform_1, window_bounds = array<i64: 32, 8>}, {pipeline_mode = #tpu.pipeline_mode<synchronous>, transform_indices = @transform_2, window_bounds = array<i64: 1, 8>}, {transform_indices = @transform_3, window_bounds = array<i64: 16, 8>}]} {
    %c0 = arith.constant 0 : index
    %c0_0 = arith.constant 0 : index
    %0 = vector.load %arg1[%c0, %c0_0] : memref<16x32xbf16, #tpu.memory_space<vmem>>, vector<16x32xbf16>
    %c0_1 = arith.constant 0 : index
    %c0_2 = arith.constant 0 : index
    %1 = vector.load %arg2[%c0_1, %c0_2] : memref<32x8xbf16, #tpu.memory_space<vmem>>, vector<32x8xbf16>
    %cst = arith.constant dense<0.000000e+00> : vector<16x8xf32>
    %2 = tpu.matmul %0, %1, %cst {dimension_numbers = #tpu.dot_dimension_numbers<[1], [0], [0], [1], [0, 0, 1, 1], [], []>} : vector<16x32xbf16>, vector<32x8xbf16>, vector<16x8xf32> -> vector<16x8xf32>
    %c0_3 = arith.constant 0 : index
    %c0_4 = arith.constant 0 : index
    %3 = vector.load %arg3[%c0_3, %c0_4] : memref<1x8xf32, #tpu.memory_space<vmem>>, vector<1x8xf32>
    %4 = vector.broadcast %3 : vector<1x8xf32> to vector<16x8xf32>
    %5 = arith.addf %2, %4 : vector<16x8xf32>
    %6 = math.absf %5 : vector<16x8xf32>
    %cst_5 = arith.constant 0.000000e+00 : f32
    %7 = vector.broadcast %cst_5 : f32 to vector<16x8xf32>
    %8 = arith.subf %7, %6 : vector<16x8xf32>
    %9 = math.exp %8 : vector<16x8xf32>
    %cst_6 = arith.constant 1.000000e+00 : f32
    %10 = vector.broadcast %cst_6 : f32 to vector<16x8xf32>
    %11 = arith.addf %10, %9 : vector<16x8xf32>
    %12 = tpu.reciprocal %11 {approx = true} : vector<16x8xf32> -> vector<16x8xf32>
    %cst_7 = arith.constant 0.000000e+00 : f32
    %13 = vector.broadcast %cst_7 : f32 to vector<16x8xf32>
    %14 = arith.cmpf oge, %5, %13 : vector<16x8xf32>
    %15 = arith.mulf %9, %12 : vector<16x8xf32>
    %16 = arith.select %14, %12, %15 : vector<16x8xi1>, vector<16x8xf32>
    %c0_8 = arith.constant 0 : index
    %c0_9 = arith.constant 0 : index
    %17 = vector.load %arg4[%c0_8, %c0_9] : memref<16x8xf32, #tpu.memory_space<vmem>>, vector<16x8xf32>
    tpu.vector_store %arg4[%c0_8, %c0_9], %16 {strides = array<i32>} : memref<16x8xf32, #tpu.memory_space<vmem>>, vector<16x8xf32>,
    return
  }
  func.func @transform_0(%arg0: i32) -> (i32, i32) {
    %c0_i32 = arith.constant 0 : i32
    %c0_i32_0 = arith.constant 0 : i32
    return %arg0, %c0_i32 : i32, i32
  }
  func.func @transform_1(%arg0: i32) -> (i32, i32) {
    %c0_i32 = arith.constant 0 : i32
    %c0_i32_0 = arith.constant 0 : i32
    %c0_i32_1 = arith.constant 0 : i32
    return %c0_i32, %c0_i32_0 : i32, i32
  }
  func.func @transform_2(%arg0: i32) -> (i32, i32) {
    %c0_i32 = arith.constant 0 : i32
    %c0_i32_0 = arith.constant 0 : i32
    %c0_i32_1 = arith.constant 0 : i32
    return %c0_i32, %c0_i32_0 : i32, i32
  }
  func.func @transform_3(%arg0: i32) -> (i32, i32) {
    %c0_i32 = arith.constant 0 : i32
    %c0_i32_0 = arith.constant 0 : i32
    return %arg0, %c0_i32 : i32, i32
  }
}

</mosaic_0001>

<llo_original>
// kernel: logistic_regression_forward.1
$region0: #{logistic_regression_forward.1}
  #allocation0 [shape = 'u32[]', space=smem, size = 0x4, offset = 0x4, fixed_abs, tag = 'smem constant byte address 0x4 - core index']
  #allocation1 [shape = 'u32[144,128]{1,0:T(1,128)}', space=vmem, size = 0x12000, scoped, tag = 'internal scratch']
  %s0 = inlined_call_operand.vmem [shape: bf16[16,32], index: 0, kind: input, shape index: {}]
  %s1 = inlined_call_operand.vmem [shape: bf16[32,8], index: 1, kind: input, shape index: {}]
  %s2 = inlined_call_operand.vmem [shape: f32[1,8], index: 2, kind: input, shape index: {}]
  %s3 = inlined_call_operand.vmem [shape: f32[16,8], index: 3, kind: output, shape index: {}]
  %s4 = sld [smem:[#allocation0]]
  $region22: #{logistic_regression_forward.1} parent=0
    _
  %s6 = ssub.s32 1, %s4
  %s7 = scalar_select 0, %s6, %s4
  // Predicated region
  $region2: #{logistic_regression_forward.1} parent=0 // pred_check
    _
  $region3: #{logistic_regression_forward.1} parent=0 // pred_check_branch
    %9 = sbr.rel (0) target = $region5
  $region4: #{logistic_regression_forward.1} parent=0 // pred_region
    _
  $region5: #{logistic_regression_forward.1} parent=0 // pred_fallthru
    _
  // Predicated region
  $region6: #{logistic_regression_forward.1} parent=0 // pred_check
    _
  $region7: #{logistic_regression_forward.1} parent=0 // pred_check_branch
    %11 = sbr.rel (0) target = $region9
  $region8: #{logistic_regression_forward.1} parent=0 // pred_region
    _
  $region9: #{logistic_regression_forward.1} parent=0 // pred_fallthru
    _
  // Predicated region
  $region10: #{logistic_regression_forward.1} parent=0 // pred_check
    _
  $region11: #{logistic_regression_forward.1} parent=0 // pred_check_branch
    %13 = sbr.rel (0) target = $region13
  $region12: #{logistic_regression_forward.1} parent=0 // pred_region
    _
  $region13: #{logistic_regression_forward.1} parent=0 // pred_fallthru
    _
  %v15 = vld [vmem:[%s0] sm:$0xf]
  %v16 = vld [vmem:[%s0 + $0x4] sm:$0xf]
  %v17 = vld [vmem:[%s1] sm:$0xf]
  %v18 = vld [vmem:[%s1 + $0x4] sm:$0xf]
  %v19 = vld [vmem:[%s1 + $0x8] sm:$0xf]
  %v20 = vld [vmem:[%s1 + $0xc] sm:$0xf]
  %v21 = vld [vmem:[%s2] sm:$0x1]
  %v23 = vlaneseq
  %v24 = vshrl.u32 %v23, 7
  %v25 = vsub.s32 0, %v24
  %v26 = vrot.slane %v21, %v25
  %v30 = vunpack.c.l.b16 %v15
  %v31 = vunpack.c.l.b16 %v16
  %v32 = vpack.c.b16 %v31, %v30
  %v37 = vunpack.c.l.b16 %v17
  %v38 = vunpack.c.l.b16 %v18
  %v39 = vunpack.c.l.b16 %v19
  %v40 = vunpack.c.l.b16 %v20
  %v41 = vpack.c.b16 %v38, %v37
  %v42 = vpack.c.b16 %v40, %v39
  %vm45 = vcmask 261120
  %v47 = vsel %vm45, %v32, 0
  %49 = vmatprep.subr.bf16.mxu0 0
  %50 = vmatpush1.bf16.msra.mxu0 %v41
  %51 = vmatprep.subr.bf16.mxu0 0
  %52 = vmatpush1.bf16.msra.mxu0 %v42
  %53 = vmatprep.subr.bf16.mxu0 0
  %54 = vmatpush1.bf16.msra.mxu0 0
  %55 = vmatprep.subr.bf16.mxu0 0
  %56 = vmatpush1.bf16.msra.mxu0 0
  %57 = vmatprep.subr.bf16.mxu0 0
  %58 = vmatpush1.bf16.msra.mxu0 0
  %59 = vmatprep.subr.bf16.mxu0 0
  %60 = vmatpush1.bf16.msra.mxu0 0
  %61 = vmatprep.subr.bf16.mxu0 0
  %62 = vmatpush1.bf16.msra.mxu0 0
  %63 = vmatprep.subr.bf16.mxu0 0
  %64 = vmatpush1.bf16.msra.mxu0 0
  %65 = vmatprep.subr.bf16.mxu0 0
  %66 = vmatpush1.bf16.msra.mxu0 0
  %67 = vmatprep.subr.bf16.mxu0 0
  %68 = vmatpush1.bf16.msra.mxu0 0
  %69 = vmatprep.subr.bf16.mxu0 0
  %70 = vmatpush1.bf16.msra.mxu0 0
  %71 = vmatprep.subr.bf16.mxu0 0
  %72 = vmatpush1.bf16.msra.mxu0 0
  %73 = vmatprep.subr.bf16.mxu0 0
  %74 = vmatpush1.bf16.msra.mxu0 0
  %75 = vmatprep.subr.bf16.mxu0 0
  %76 = vmatpush1.bf16.msra.mxu0 0
  %77 = vmatprep.subr.bf16.mxu0 0
  %78 = vmatpush1.bf16.msra.mxu0 0
  %79 = vmatprep.subr.bf16.mxu0 0
  %80 = vmatpush1.bf16.msra.mxu0 0
  %81 = vmatprep.mubr.bf16.mxu0 0
  %82 = vmatmul.mubr.bf16.gmra.mrb[0].mxu0 %v47
  %v83 = vpop.f32.mrb[0].mxu0
  %v84 = vadd.f32 %v26, %v83
  %v85 = vpop.f32.mrb[0].mxu0
  %v86 = vpop.f32.mrb[0].mxu0
  %v87 = vadd.f32 %v26, %v86
  %v88 = vpop.f32.mrb[0].mxu0
  %89 = vdwg.mxu0
  %v90 = vand.u32 2147483647, %v84
  %v91 = vand.u32 2147483647, %v87
  %v92 = vsub.f32 0.0, %v90
  %v93 = vsub.f32 0.0, %v91
  %v94 = vmul.f32 %v92, 1.442695
  %v95 = vpow.pop %v94
  %v96 = vmul.f32 %v93, 1.442695
  %v97 = vpow.pop %v96
  %v98 = vadd.f32 %v95, 1.0
  %v99 = vadd.f32 %v97, 1.0
  %v100 = vrcp.pop %v98
  %v101 = vrcp.pop %v99
  %vm102 = vcmp.ge.f32.partialorder %v84, 0.0
  %vm103 = vcmp.ge.f32.partialorder %v87, 0.0
  %v104 = vmul.f32 %v95, %v100
  %v105 = vmul.f32 %v97, %v101
  %v106 = vsel %vm102, %v100, %v104
  %v107 = vsel %vm103, %v101, %v105
  %vm108 = vcmask 64512
  %109 = vst.msk [vmem:[%s3] sm:$0xff] %vm108, %v106
  %110 = vst.msk [vmem:[%s3 + $0x8] sm:$0xff] %vm108, %v107
  // Predicated region
  $region14: #{logistic_regression_forward.1} parent=0 // pred_check
    _
  $region15: #{logistic_regression_forward.1} parent=0 // pred_check_branch
    %112 = sbr.rel (0) target = $region17
  $region16: #{logistic_regression_forward.1} parent=0 // pred_region
    _
  $region17: #{logistic_regression_forward.1} parent=0 // pred_fallthru
    _
  // Predicated region
  $region18: #{logistic_regression_forward.1} parent=0 // pred_check
    _
  $region19: #{logistic_regression_forward.1} parent=0 // pred_check_branch
    %114 = sbr.rel (0) target = $region21
  $region20: #{logistic_regression_forward.1} parent=0 // pred_region
    _
  $region21: #{logistic_regression_forward.1} parent=0 // pred_fallthru
    _

</llo_original>
